<compile_context>
chip_gen: v5e
topology: v5e:2x2
jax: 0.10.0
libtpu: 0.0.40
codegen_flags: <defaults>
</compile_context>

<pallas_src>
import functools

import numpy as np
import jax
import jax.numpy as jnp
from jax.experimental import pallas as pl
from jax.experimental.pallas import tpu as pltpu

_LANE = 128
_SIGN_MASK = 0x80000000


def _mth_kernel(*refs, num_thresholds, use_abs, has_mem, const_params):
    """Elementwise multi-threshold spiking kernel.

    Ref layout (in order):
      [params_ref]            SMEM (3K,) f32 [gates | thre | weights]   (only if const_params is None)
      x_ref [, mem_ref]       VMEM (block_rows, 128) f32 inputs
      spike_ref, newmem_ref   VMEM (block_rows, 128) f32 outputs
    """
    K = num_thresholds
    if const_params is None:
        params_ref = refs[0]
        refs = refs[1:]

        def gate(k):
            return params_ref[k]

        def thre(k):
            return params_ref[K + k]

        def weight(k):
            return params_ref[2 * K + k]
    else:
        gates_c, thre_c, weights_c = const_params

        def gate(k):
            return jnp.float32(gates_c[k])

        def thre(k):
            return jnp.float32(thre_c[k])

        def weight(k):
            return jnp.float32(weights_c[k])

    if has_mem:
        x_ref, mem_ref, spike_ref, newmem_ref = refs
        mem = mem_ref[...] + x_ref[...]
    else:
        x_ref, spike_ref, newmem_ref = refs
        mem = x_ref[...]                      # T == 0: previous membrane is all-zero

    if use_abs:
        # thresh > 0: gates strictly decrease with k, so the spike magnitude is
        # exactly thre_{k_min} where k_min is the first crossed level. Build it
        # with a select chain from the smallest gate upward (cmp + sel per level),
        # then transplant mem's sign bit (copysign) — bit-exact vs. reference.
        a = jnp.abs(mem)
        mag = jnp.zeros_like(mem)
        for k in range(K - 1, -1, -1):        # K is small (8): fully unrolled
            mag = jnp.where(a >= gate(k), thre(k), mag)
        sign_bit = pltpu.bitcast(mem, jnp.uint32) & jnp.uint32(_SIGN_MASK)
        spike = pltpu.bitcast(pltpu.bitcast(mag, jnp.uint32) | sign_bit, jnp.float32)
    else:
        # Exact two-compare telescoped form (valid for any sign of thresh).
        spike = jnp.zeros_like(mem)
        for k in range(K):
            g = gate(k)
            w = weight(k)
            pos = (mem >= g).astype(mem.dtype)
            neg = (mem <= -g).astype(mem.dtype)
            spike = spike + w * (pos - neg)

    spike_ref[...] = spike
    newmem_ref[...] = mem - spike


def _pick_block_rows(rows):
    """Pick the streaming block height from the VMEM budget (no divisibility cliff)."""
    try:
        vmem_bytes = int(pltpu.get_tpu_info().vmem_capacity_bytes)
    except Exception:
        vmem_bytes = 64 * 1024 * 1024         # conservative default (v7x per-core VMEM)
    # 4 MiB blocks on 128-MiB-VMEM chips (v5e/v6e), 2 MiB on smaller (v7x).
    cap = 8192 if vmem_bytes >= 100 * 1024 * 1024 else 4096
    rows8 = -(-rows // 8) * 8                 # round up to the (8,128) vreg tile
    return min(cap, rows8)


def mth_with_neg_line_step(x, thresh, mem=None, num_thresholds=8,
                           assume_positive_thresh=None):
    """One forward step of MTH_with_neg_line (step_mode='s').

    x      : NCHW (any shape) activation.
    thresh : scalar threshold (python float -> constants baked; traced -> SMEM prefetch).
    mem    : previous membrane potential (same shape as x), or None for T == 0.
    assume_positive_thresh : static flag enabling the |mem| fast path when thresh
                             is traced but known positive (training).
    Returns (spike, new_mem), both in x's shape, float32.
    """
    orig_shape = x.shape
    x = jnp.asarray(x, jnp.float32)
    has_mem = mem is not None
    if has_mem:
        mem = jnp.asarray(mem, jnp.float32)

    K = num_thresholds

    # Static (compile-time) threshold?  Bake per-level constants and skip SMEM.
    try:
        thresh_val = float(thresh)
        static_thresh = True
    except Exception:
        thresh_val = None
        static_thresh = False

    if assume_positive_thresh is None:
        use_abs = bool(static_thresh and thresh_val > 0.0)
    else:
        use_abs = bool(assume_positive_thresh)

    if static_thresh:
        thre_np = (np.float32(thresh_val) * np.float32(0.5) ** np.arange(K)).astype(np.float32)
        gates_np = (np.float32(0.75) * thre_np).astype(np.float32)
        w_np = np.concatenate([thre_np[:-1] * np.float32(0.5), thre_np[-1:]]).astype(np.float32)
        const_params = (tuple(float(v) for v in gates_np),
                        tuple(float(v) for v in thre_np),
                        tuple(float(v) for v in w_np))
        params = None
    else:
        thresh_f = jnp.asarray(thresh, jnp.float32).reshape(())
        scale = jnp.asarray(0.5 ** np.arange(K), dtype=jnp.float32)
        thre = thresh_f * scale
        gates = jnp.float32(0.75) * thre
        weights = jnp.concatenate([thre[:-1] * jnp.float32(0.5), thre[-1:]])
        params = jnp.concatenate([gates, thre, weights])   # (3K,) -> SMEM prefetch
        const_params = None

    # ---- tiling: pad flattened tensor up to a multiple of the block ----
    total = int(np.prod(orig_shape))
    rows = -(-total // _LANE)
    block_rows = _pick_block_rows(rows)
    padded_rows = -(-rows // block_rows) * block_rows
    padded_total = padded_rows * _LANE
    grid = (padded_rows // block_rows,)

    def _prep(a):
        flat = a.reshape(-1)
        if padded_total != total:
            flat = jnp.pad(flat, (0, padded_total - total))
        return flat.reshape(padded_rows, _LANE)

    xf = _prep(x)
    memf = _prep(mem) if has_mem else None

    if static_thresh:
        num_prefetch = 0
        idx_map = lambda i: (i, 0)
        ops = (xf,) + ((memf,) if has_mem else ())
        mem_input_index = 1
    else:
        num_prefetch = 1
        idx_map = lambda i, p: (i, 0)
        ops = (params, xf) + ((memf,) if has_mem else ())
        mem_input_index = 2                   # scalar-prefetch operand counts too

    n_streams = (2 if has_mem else 1) + 2     # array inputs + 2 outputs
    in_specs = [pl.BlockSpec((block_rows, _LANE), idx_map)] * (2 if has_mem else 1)
    out_specs = [pl.BlockSpec((block_rows, _LANE), idx_map),
                 pl.BlockSpec((block_rows, _LANE), idx_map)]

    block_bytes = block_rows * _LANE * 4
    vmem_limit = n_streams * 2 * block_bytes + (8 << 20)
    vmem_limit = int(min(max(vmem_limit, 32 << 20), 48 << 20))

    io_aliases = {mem_input_index: 1} if has_mem else {}

    kernel = functools.partial(_mth_kernel, num_thresholds=K, use_abs=use_abs,
                               has_mem=has_mem, const_params=const_params)

    cost = pl.CostEstimate(flops=(20 if use_abs else 7 * K) * padded_total,
                           transcendentals=0,
                           bytes_accessed=n_streams * padded_total * 4)

    spike, new_mem = pl.pallas_call(
        kernel,
        out_shape=(
            jax.ShapeDtypeStruct((padded_rows, _LANE), jnp.float32),
            jax.ShapeDtypeStruct((padded_rows, _LANE), jnp.float32),
        ),
        grid_spec=pltpu.PrefetchScalarGridSpec(
            num_scalar_prefetch=num_prefetch,
            grid=grid,
            in_specs=in_specs,
            out_specs=out_specs,
        ),
        compiler_params=pltpu.CompilerParams(
            dimension_semantics=("parallel",),   # megacore / v7x 2-TC sharding
            vmem_limit_bytes=vmem_limit,
        ),
        cost_estimate=cost,
        input_output_aliases=io_aliases,
    )(*ops)

    def _unpad(a):
        if padded_total != total:
            a = a.reshape(-1)[:total]
        return a.reshape(orig_shape)

    return _unpad(spike), _unpad(new_mem)


def _reference(x, mem, thresh, num_thresholds=8):
    """Pure-JAX reference mirroring the PyTorch forward exactly."""
    mem = mem + x
    k = jnp.arange(num_thresholds, dtype=jnp.float32)
    thre = (jnp.asarray(thresh, jnp.float32) / (2.0 ** k)).reshape(
        (num_thresholds,) + (1,) * x.ndim)
    gate = thre * 0.75
    pos_false = (mem[None] >= gate).astype(jnp.float32)
    neg_false = (mem[None] <= -gate).astype(jnp.float32)
    pos_true = pos_false.at[1:].add(-pos_false[:-1])
    neg_true = neg_false.at[1:].add(-neg_false[:-1])
    spike = jnp.sum(thre * pos_true, axis=0) - jnp.sum(thre * neg_true, axis=0)
    return spike, mem - spike


if __name__ == "__main__":
    key = jax.random.PRNGKey(0)
    k1, k2, k3 = jax.random.split(key, 3)
    N, C, H, W = 2, 4, 16, 16                 # NCHW feature-map shape
    thresh = 1.0                              # nn.Parameter init
    K = 8

    x1 = jax.random.normal(k1, (N, C, H, W), dtype=jnp.float32) * 1.5
    x2 = jax.random.normal(k2, (N, C, H, W), dtype=jnp.float32) * 1.5

    # T == 0 step (module zero-initializes mem): mem input elided, constants baked.
    spike1, mem1 = mth_with_neg_line_step(x1, thresh, mem=None, num_thresholds=K)
    # T == 1 step (carried membrane potential, mem aliased to new_mem output).
    spike2, mem2 = mth_with_neg_line_step(x2, thresh, mem=mem1, num_thresholds=K)
    # Fallback (two-compare) path, exercised with a non-positive thresh.
    spike3, mem3 = mth_with_neg_line_step(x1, -0.7, mem=None, num_thresholds=K)

    # Traced-thresh (training) paths: SMEM scalar prefetch, with/without the
    # static positive-thresh fast-path flag.
    jit_abs = jax.jit(lambda xx, th, mm: mth_with_neg_line_step(
        xx, th, mem=mm, num_thresholds=K, assume_positive_thresh=True))
    jit_gen = jax.jit(lambda xx, th: mth_with_neg_line_step(
        xx, th, mem=None, num_thresholds=K))
    spike4, mem4 = jit_abs(x2, jnp.float32(thresh), mem1)
    spike5, mem5 = jit_gen(x1, jnp.float32(thresh))

    # Non-128-divisible shape exercises the padding path.
    x_odd = jax.random.normal(k3, (3, 5, 7, 11), dtype=jnp.float32) * 1.5
    spike6, mem6 = mth_with_neg_line_step(x_odd, thresh, mem=None, num_thresholds=K)

    jax.block_until_ready((spike1, mem1, spike2, mem2, spike3, mem3,
                           spike4, mem4, spike5, mem5, spike6, mem6))

    r_spike1, r_mem1 = _reference(x1, jnp.zeros_like(x1), thresh, K)
    r_spike2, r_mem2 = _reference(x2, r_mem1, thresh, K)
    r_spike3, r_mem3 = _reference(x1, jnp.zeros_like(x1), -0.7, K)
    r_spike6, r_mem6 = _reference(x_odd, jnp.zeros_like(x_odd), thresh, K)

    assert jnp.allclose(spike1, r_spike1, atol=1e-5), "spike (T=0) mismatch"
    assert jnp.allclose(mem1, r_mem1, atol=1e-5), "mem (T=0) mismatch"
    assert jnp.allclose(spike2, r_spike2, atol=1e-5), "spike (T=1) mismatch"
    assert jnp.allclose(mem2, r_mem2, atol=1e-5), "mem (T=1) mismatch"
    assert jnp.allclose(spike3, r_spike3, atol=1e-5), "spike (neg thresh) mismatch"
    assert jnp.allclose(mem3, r_mem3, atol=1e-5), "mem (neg thresh) mismatch"
    assert jnp.allclose(spike4, r_spike2, atol=1e-5), "spike (traced thresh, abs) mismatch"
    assert jnp.allclose(mem4, r_mem2, atol=1e-5), "mem (traced thresh, abs) mismatch"
    assert jnp.allclose(spike5, r_spike1, atol=1e-5), "spike (traced thresh, general) mismatch"
    assert jnp.allclose(mem5, r_mem1, atol=1e-5), "mem (traced thresh, general) mismatch"
    assert jnp.allclose(spike6, r_spike6, atol=1e-5), "spike (odd shape) mismatch"
    assert jnp.allclose(mem6, r_mem6, atol=1e-5), "mem (odd shape) mismatch"

    print("KERNEL_OK")
</pallas_src>

<mosaic_0001>
module attributes {stable_mosaic.version = 11 : i64} {
  func.func @_mth_kernel(%arg0: i32, %arg1: memref<16x128xf32, #tpu.memory_space<vmem>>, %arg2: memref<16x128xf32, #tpu.memory_space<vmem>>, %arg3: memref<16x128xf32, #tpu.memory_space<vmem>>) attributes {dimension_semantics = [#tpu.dimension_semantics<parallel>], iteration_bounds = array<i64: 1>, scalar_prefetch = 0 : i64, scratch_operands = 0 : i64, tpu.core_type = #tpu.core_type<tc>, window_params = [{transform_indices = @transform_0, window_bounds = array<i64: 16, 128>}, {transform_indices = @transform_1, window_bounds = array<i64: 16, 128>}, {transform_indices = @transform_2, window_bounds = array<i64: 16, 128>}]} {
    %c0 = arith.constant 0 : index
    %c0_0 = arith.constant 0 : index
    %0 = vector.load %arg1[%c0, %c0_0] : memref<16x128xf32, #tpu.memory_space<vmem>>, vector<16x128xf32>
    %1 = math.absf %0 : vector<16x128xf32>
    %cst = arith.constant 0.000000e+00 : f32
    %2 = vector.broadcast %cst : f32 to vector<16x128xf32>
    %cst_1 = arith.constant 0.005859375 : f32
    %3 = vector.broadcast %cst_1 : f32 to vector<16x128xf32>
    %4 = arith.cmpf oge, %1, %3 : vector<16x128xf32>
    %cst_2 = arith.constant 7.812500e-03 : f32
    %5 = vector.broadcast %cst_2 : f32 to vector<16x128xf32>
    %6 = arith.select %4, %5, %2 : vector<16x128xi1>, vector<16x128xf32>
    %cst_3 = arith.constant 0.01171875 : f32
    %7 = vector.broadcast %cst_3 : f32 to vector<16x128xf32>
    %8 = arith.cmpf oge, %1, %7 : vector<16x128xf32>
    %cst_4 = arith.constant 1.562500e-02 : f32
    %9 = vector.broadcast %cst_4 : f32 to vector<16x128xf32>
    %10 = arith.select %8, %9, %6 : vector<16x128xi1>, vector<16x128xf32>
    %cst_5 = arith.constant 2.343750e-02 : f32
    %11 = vector.broadcast %cst_5 : f32 to vector<16x128xf32>
    %12 = arith.cmpf oge, %1, %11 : vector<16x128xf32>
    %cst_6 = arith.constant 3.125000e-02 : f32
    %13 = vector.broadcast %cst_6 : f32 to vector<16x128xf32>
    %14 = arith.select %12, %13, %10 : vector<16x128xi1>, vector<16x128xf32>
    %cst_7 = arith.constant 4.687500e-02 : f32
    %15 = vector.broadcast %cst_7 : f32 to vector<16x128xf32>
    %16 = arith.cmpf oge, %1, %15 : vector<16x128xf32>
    %cst_8 = arith.constant 6.250000e-02 : f32
    %17 = vector.broadcast %cst_8 : f32 to vector<16x128xf32>
    %18 = arith.select %16, %17, %14 : vector<16x128xi1>, vector<16x128xf32>
    %cst_9 = arith.constant 9.375000e-02 : f32
    %19 = vector.broadcast %cst_9 : f32 to vector<16x128xf32>
    %20 = arith.cmpf oge, %1, %19 : vector<16x128xf32>
    %cst_10 = arith.constant 1.250000e-01 : f32
    %21 = vector.broadcast %cst_10 : f32 to vector<16x128xf32>
    %22 = arith.select %20, %21, %18 : vector<16x128xi1>, vector<16x128xf32>
    %cst_11 = arith.constant 1.875000e-01 : f32
    %23 = vector.broadcast %cst_11 : f32 to vector<16x128xf32>
    %24 = arith.cmpf oge, %1, %23 : vector<16x128xf32>
    %cst_12 = arith.constant 2.500000e-01 : f32
    %25 = vector.broadcast %cst_12 : f32 to vector<16x128xf32>
    %26 = arith.select %24, %25, %22 : vector<16x128xi1>, vector<16x128xf32>
    %cst_13 = arith.constant 3.750000e-01 : f32
    %27 = vector.broadcast %cst_13 : f32 to vector<16x128xf32>
    %28 = arith.cmpf oge, %1, %27 : vector<16x128xf32>
    %cst_14 = arith.constant 5.000000e-01 : f32
    %29 = vector.broadcast %cst_14 : f32 to vector<16x128xf32>
    %30 = arith.select %28, %29, %26 : vector<16x128xi1>, vector<16x128xf32>
    %cst_15 = arith.constant 7.500000e-01 : f32
    %31 = vector.broadcast %cst_15 : f32 to vector<16x128xf32>
    %32 = arith.cmpf oge, %1, %31 : vector<16x128xf32>
    %cst_16 = arith.constant 1.000000e+00 : f32
    %33 = vector.broadcast %cst_16 : f32 to vector<16x128xf32>
    %34 = arith.select %32, %33, %30 : vector<16x128xi1>, vector<16x128xf32>
    %35 = tpu.bitcast %0 : vector<16x128xf32> -> vector<16x128xi32>
    %c-2147483648_i32 = arith.constant -2147483648 : i32
    %36 = vector.broadcast %c-2147483648_i32 : i32 to vector<16x128xi32>
    %37 = arith.andi %35, %36 : vector<16x128xi32>
    %38 = tpu.bitcast %34 : vector<16x128xf32> -> vector<16x128xi32>
    %39 = arith.ori %38, %37 : vector<16x128xi32>
    %40 = tpu.bitcast %39 : vector<16x128xi32> -> vector<16x128xf32>
    %c0_17 = arith.constant 0 : index
    %c0_18 = arith.constant 0 : index
    %41 = vector.load %arg2[%c0_17, %c0_18] : memref<16x128xf32, #tpu.memory_space<vmem>>, vector<16x128xf32>
    tpu.vector_store %arg2[%c0_17, %c0_18], %40 {strides = array<i32>} : memref<16x128xf32, #tpu.memory_space<vmem>>, vector<16x128xf32>,
    %42 = arith.subf %0, %40 : vector<16x128xf32>
    %c0_19 = arith.constant 0 : index
    %c0_20 = arith.constant 0 : index
    %43 = vector.load %arg3[%c0_19, %c0_20] : memref<16x128xf32, #tpu.memory_space<vmem>>, vector<16x128xf32>
    tpu.vector_store %arg3[%c0_19, %c0_20], %42 {strides = array<i32>} : memref<16x128xf32, #tpu.memory_space<vmem>>, vector<16x128xf32>,
    return
  }
  func.func @transform_0(%arg0: i32) -> (i32, i32) {
    %c0_i32 = arith.constant 0 : i32
    %c0_i32_0 = arith.constant 0 : i32
    return %arg0, %c0_i32 : i32, i32
  }
  func.func @transform_1(%arg0: i32) -> (i32, i32) {
    %c0_i32 = arith.constant 0 : i32
    %c0_i32_0 = arith.constant 0 : i32
    return %arg0, %c0_i32 : i32, i32
  }
  func.func @transform_2(%arg0: i32) -> (i32, i32) {
    %c0_i32 = arith.constant 0 : i32
    %c0_i32_0 = arith.constant 0 : i32
    return %arg0, %c0_i32 : i32, i32
  }
}

</mosaic_0001>

<llo_original>
// kernel: tpu_custom_call.1
$region0: #{tpu_custom_call.1}
  #allocation0 [shape = 'u32[]', space=smem, size = 0x4, offset = 0x4, fixed_abs, tag = 'smem constant byte address 0x4 - core index']
  #allocation1 [shape = 'u32[72,128]{1,0:T(1,128)}', space=vmem, size = 0x9000, scoped, tag = 'internal scratch']
  %s0 = inlined_call_operand.hbm [shape: f32[16,128], index: 0, kind: input, shape index: {}]
  %s1 = inlined_call_operand.hbm [shape: f32[16,128], index: 1, kind: output, shape index: {0}]
  %s2 = inlined_call_operand.hbm [shape: f32[16,128], index: 2, kind: output, shape index: {1}]
  %3 = xla_tuple %s1, %s2
  %s4 = sld [smem:[#allocation0]]
  $region26: #{tpu_custom_call.1} parent=0
    _
  %s6 = ssub.s32 1, %s4
  %s7 = scalar_select 0, %s6, %s4
  $region1: #{tpu_custom_call.1} parent=0
    #allocation2 [shape = 'u8[8192]{0}', space=vmem, size = 0x2000, scoped, tag = 'input window, operand 0, single buffered']
    #allocation3 [shape = 's32[1]{0}', space=sflag, size = 0x4, scoped, tag = 'scoped memory for tpu_custom_call.1']
    #allocation4 [shape = 's32[1]{0}', space=sflag, size = 0x4, scoped, tag = 'scoped memory for tpu_custom_call.1']
    #allocation5 [shape = 'u8[8192]{0}', space=vmem, size = 0x2000, scoped, tag = 'output window, operand 0, single buffered']
    #allocation6 [shape = 'u8[8192]{0}', space=vmem, size = 0x2000, scoped, tag = 'output window, operand 1, single buffered']
    #allocation7 [shape = 's32[1]{0}', space=sflag, size = 0x4, scoped, tag = 'scoped memory for tpu_custom_call.1']
    %8 = vsyncpa [#allocation3], 0
    %9 = vsyncpa [#allocation4], 0
    %10 = vsyncpa [#allocation7], 0
    // Predicated region
    $region2: #{tpu_custom_call.1} parent=1 // pred_check
      _
    $region3: #{tpu_custom_call.1} parent=1 // pred_check_branch
      %12 = sbr.rel (0) target = $region5
    $region4: #{tpu_custom_call.1} parent=1 // pred_region
      %14 = vsyncadd [#allocation3], 0
      %s15 = sshll.u32 %s0, 4
      %s16 = int_to_ptr.hbm [resolvable:$true] %s15
      %s17 = sshll.u32 [#allocation2], 4
      %s18 = int_to_ptr.vmem [resolvable:$true] %s17
      %23 = dma.hbm_to_vmem [thread:$0]  %s16, 256, %s18, [#allocation3], 128, 128, 8
    $region5: #{tpu_custom_call.1} parent=1 // pred_fallthru
      _
    // Predicated region
    $region6: #{tpu_custom_call.1} parent=1 // pred_check
      _
    $region7: #{tpu_custom_call.1} parent=1 // pred_check_branch
      %25 = sbr.rel (0) target = $region9
    $region8: #{tpu_custom_call.1} parent=1 // pred_region
      %27 = dma.done [#allocation3], 256
    $region9: #{tpu_custom_call.1} parent=1 // pred_fallthru
      _
    %v28 = vld [vmem:[#allocation2] sm:$0xff]
    %v29 = vld [vmem:[#allocation2 + $0x8] sm:$0xff]
    %v30 = vand.u32 2147483647, %v28
    %v31 = vand.u32 2147483647, %v29
    %vm32 = vcmp.ge.f32.partialorder %v30, 0.005859375
    %vm33 = vcmp.ge.f32.partialorder %v31, 0.005859375
    %v34 = vsel %vm32, 0.0078125, 0.0
    %v35 = vsel %vm33, 0.0078125, 0.0
    %vm36 = vcmp.ge.f32.partialorder %v30, 0.01171875
    %vm37 = vcmp.ge.f32.partialorder %v31, 0.01171875
    %v38 = vsel %vm36, 0.015625, %v34
    %v39 = vsel %vm37, 0.015625, %v35
    %vm40 = vcmp.ge.f32.partialorder %v30, 0.0234375
    %vm41 = vcmp.ge.f32.partialorder %v31, 0.0234375
    %v42 = vsel %vm40, 0.03125, %v38
    %v43 = vsel %vm41, 0.03125, %v39
    %vm44 = vcmp.ge.f32.partialorder %v30, 0.046875
    %vm45 = vcmp.ge.f32.partialorder %v31, 0.046875
    %v46 = vsel %vm44, 0.0625, %v42
    %v47 = vsel %vm45, 0.0625, %v43
    %vm48 = vcmp.ge.f32.partialorder %v30, 0.09375
    %vm49 = vcmp.ge.f32.partialorder %v31, 0.09375
    %v50 = vsel %vm48, 0.125, %v46
    %v51 = vsel %vm49, 0.125, %v47
    %vm52 = vcmp.ge.f32.partialorder %v30, 0.1875
    %vm53 = vcmp.ge.f32.partialorder %v31, 0.1875
    %v54 = vsel %vm52, 0.25, %v50
    %v55 = vsel %vm53, 0.25, %v51
    %vm56 = vcmp.ge.f32.partialorder %v30, 0.375
    %vm57 = vcmp.ge.f32.partialorder %v31, 0.375
    %v58 = vsel %vm56, 0.5, %v54
    %v59 = vsel %vm57, 0.5, %v55
    %vm60 = vcmp.ge.f32.partialorder %v30, 0.75
    %vm61 = vcmp.ge.f32.partialorder %v31, 0.75
    %v62 = vsel %vm60, 1.0, %v58
    %v63 = vsel %vm61, 1.0, %v59
    %v66 = vand.u32 %v28, 2147483648
    %v67 = vand.u32 %v29, 2147483648
    %v70 = vor.u32 %v62, %v66
    %v71 = vor.u32 %v63, %v67
    %74 = vst [vmem:[#allocation5] sm:$0xff] %v70
    %75 = vst [vmem:[#allocation5 + $0x8] sm:$0xff] %v71
    %v76 = vsub.f32 %v28, %v70
    %v77 = vsub.f32 %v29, %v71
    %78 = vst [vmem:[#allocation6] sm:$0xff] %v76
    %79 = vst [vmem:[#allocation6 + $0x8] sm:$0xff] %v77
    // Predicated region
    $region10: #{tpu_custom_call.1} parent=1 // pred_check
      _
    $region11: #{tpu_custom_call.1} parent=1 // pred_check_branch
      %81 = sbr.rel (0) target = $region13
    $region12: #{tpu_custom_call.1} parent=1 // pred_region
      %83 = vsyncadd [#allocation4], 0
      %s84 = sshll.u32 [#allocation5], 4
      %s85 = int_to_ptr.vmem [resolvable:$true] %s84
      %s86 = sshll.u32 %s1, 4
      %s87 = int_to_ptr.hbm [resolvable:$true] %s86
      %92 = dma.vmem_to_hbm [thread:$0]  %s85, 256, %s87, [#allocation4], 128, 128, 8
    $region13: #{tpu_custom_call.1} parent=1 // pred_fallthru
      _
    // Predicated region
    $region14: #{tpu_custom_call.1} parent=1 // pred_check
      _
    $region15: #{tpu_custom_call.1} parent=1 // pred_check_branch
      %94 = sbr.rel (0) target = $region17
    $region16: #{tpu_custom_call.1} parent=1 // pred_region
      %96 = vsyncadd [#allocation7], 0
      %s97 = sshll.u32 [#allocation6], 4
      %s98 = int_to_ptr.vmem [resolvable:$true] %s97
      %s99 = sshll.u32 %s2, 4
      %s100 = int_to_ptr.hbm [resolvable:$true] %s99
      %105 = dma.vmem_to_hbm [thread:$0]  %s98, 256, %s100, [#allocation7], 128, 128, 8
    $region17: #{tpu_custom_call.1} parent=1 // pred_fallthru
      _
    // Predicated region
    $region18: #{tpu_custom_call.1} parent=1 // pred_check
      _
    $region19: #{tpu_custom_call.1} parent=1 // pred_check_branch
      %107 = sbr.rel (0) target = $region21
    $region20: #{tpu_custom_call.1} parent=1 // pred_region
      %109 = dma.done [#allocation4], 256
    $region21: #{tpu_custom_call.1} parent=1 // pred_fallthru
      _
    // Predicated region
    $region22: #{tpu_custom_call.1} parent=1 // pred_check
      _
    $region23: #{tpu_custom_call.1} parent=1 // pred_check_branch
      %111 = sbr.rel (0) target = $region25
    $region24: #{tpu_custom_call.1} parent=1 // pred_region
      %113 = dma.done [#allocation7], 256
    $region25: #{tpu_custom_call.1} parent=1 // pred_fallthru
      _
    %114 = vsyncpa [#allocation3], 1
    %115 = vsyncpa [#allocation4], 1
    %116 = vsyncpa [#allocation7], 1

</llo_original>
